<compile_context>
chip_gen: v6e
topology: v6e:2x2x1
jax: 0.10.0
libtpu: 0.0.40
codegen_flags: <defaults>
</compile_context>

<pallas_src>
import functools

import jax
import jax.numpy as jnp
from jax.experimental import pallas as pl
from jax.experimental.pallas import tpu as pltpu


def _ce_label_smooth_kernel(x_ref, t_ref, out_ref, acc_ref, *,
                            epsilon, num_classes, batch):
    i = pl.program_id(0)
    tb, k = x_ref.shape

    @pl.when(i == 0)
    def _init():
        acc_ref[...] = jnp.zeros_like(acc_ref)

    x = x_ref[...].astype(jnp.float32)       # (TB, K) logits (bf16 upcast here)
    tgt = t_ref[...]                         # (TB, 1) int32 labels

    # Row-wise logsumexp (numerically stable), kept 2-D.
    m = jnp.max(x, axis=1, keepdims=True)                        # (TB, 1)
    se = jnp.sum(jnp.exp(x - m), axis=1, keepdims=True)          # (TB, 1)
    lse = m + jnp.log(se)                                        # (TB, 1)

    # Smoothed target weights fused into ONE cross-lane reduction:
    #   w_k = eps/K + (1 - eps) * onehot_k  (sum_k w_k == 1)
    lane = jax.lax.broadcasted_iota(jnp.int32, (tb, k), 1)
    w = jnp.float32(epsilon / num_classes) + jnp.where(
        lane == tgt, jnp.float32(1.0 - epsilon), jnp.float32(0.0))
    wx = jnp.sum(w * x, axis=1, keepdims=True)                   # (TB, 1)

    # -sum_k w_k * log_softmax(x)_k == lse - wx   (since sum_k w_k == 1)
    per_row = lse - wx                                           # (TB, 1)

    # Mask rows of a ragged last tile (garbage beyond the true batch).
    rows = jax.lax.broadcasted_iota(jnp.int32, (tb, 1), 0) + i * tb
    per_row = jnp.where(rows < batch, per_row, jnp.float32(0.0))

    acc_ref[...] = acc_ref[...] + jnp.sum(per_row)

    @pl.when(i == pl.num_programs(0) - 1)
    def _finalize():
        out_ref[...] = acc_ref[...] * jnp.float32(1.0 / batch)


def _round_up(x, m):
    return ((x + m - 1) // m) * m


def _choose_batch_tile(batch, num_classes, itemsize):
    """Largest multiple-of-8 batch tile whose double-buffered logits fit ~VMEM/8."""
    try:
        vmem_bytes = pltpu.get_tpu_info().vmem_capacity_bytes
    except Exception:
        vmem_bytes = 64 * 1024 * 1024  # conservative (v7x per-TC VMEM)
    budget = vmem_bytes // 8           # leaves ample pipelining / scratch headroom
    per_row = 2 * num_classes * itemsize  # x2 for double buffering
    tb = budget // max(per_row, 1)
    tb = max(8, min(1024, (tb // 8) * 8))
    tb = min(tb, _round_up(batch, 8))
    return int(tb)


def cross_entropy_label_smooth(inputs, targets, *, num_classes=None,
                               epsilon=0.1, block_batch=None):
    """Pallas TPU implementation of CrossEntropyLabelSmooth.forward.

    inputs:  (B, K) logits (f32 or bf16). targets: (B,) integer labels.
    Returns a scalar f32 loss, matching (-t_smooth * log_softmax(x)).mean(0).sum().
    """
    B, K = inputs.shape
    if num_classes is None:
        num_classes = K
    itemsize = jnp.dtype(inputs.dtype).itemsize

    tb = int(block_batch) if block_batch is not None else _choose_batch_tile(
        B, K, itemsize)
    num_tiles = pl.cdiv(B, tb)

    targets_2d = targets.astype(jnp.int32).reshape(B, 1)

    # Explicit scoped-VMEM limit: double-buffered logits + targets + headroom.
    need = 2 * (tb * K * itemsize + tb * 4)
    vmem_limit = max(int(need) + (4 << 20), 16 << 20)

    kernel = functools.partial(
        _ce_label_smooth_kernel,
        epsilon=float(epsilon),
        num_classes=int(num_classes),
        batch=int(B),
    )

    out = pl.pallas_call(
        kernel,
        out_shape=jax.ShapeDtypeStruct((1, 1), jnp.float32),
        grid=(num_tiles,),
        in_specs=[
            pl.BlockSpec((tb, K), lambda i: (i, 0)),   # logits tile
            pl.BlockSpec((tb, 1), lambda i: (i, 0)),   # labels tile
        ],
        out_specs=pl.BlockSpec((1, 1), lambda i: (0, 0)),
        scratch_shapes=[pltpu.VMEM((1, 1), jnp.float32)],
        compiler_params=pltpu.CompilerParams(
            dimension_semantics=("arbitrary",),
            vmem_limit_bytes=vmem_limit,
        ),
    )(inputs, targets_2d)
    return out[0, 0]


def _reference(inputs, targets, epsilon):
    B, K = inputs.shape
    log_probs = jax.nn.log_softmax(inputs.astype(jnp.float32), axis=1)
    onehot = jax.nn.one_hot(targets, K, dtype=jnp.float32)
    smooth = (1.0 - epsilon) * onehot + epsilon / K
    return jnp.sum(jnp.mean(-smooth * log_probs, axis=0))


if __name__ == "__main__":
    key = jax.random.PRNGKey(0)
    k_x, k_t = jax.random.split(key)

    B, K = 20, 32           # small: batch=20, num_classes=32 (ragged vs. TB=8)
    eps = 0.1
    inputs = jax.random.normal(k_x, (B, K), dtype=jnp.float32)
    targets = jax.random.randint(k_t, (B,), 0, K, dtype=jnp.int32)

    ref = _reference(inputs, targets, eps)

    # Multi-tile path (grid of 3, ragged last tile of 4 valid rows).
    loss_tiled = cross_entropy_label_smooth(
        inputs, targets, num_classes=K, epsilon=eps, block_batch=8)
    loss_tiled = jax.block_until_ready(loss_tiled)
    assert jnp.allclose(loss_tiled, ref, rtol=1e-5, atol=1e-5), (loss_tiled, ref)

    # Auto tile-size path (single tile here).
    loss_auto = cross_entropy_label_smooth(
        inputs, targets, num_classes=K, epsilon=eps)
    loss_auto = jax.block_until_ready(loss_auto)
    assert jnp.allclose(loss_auto, ref, rtol=1e-5, atol=1e-5), (loss_auto, ref)

    print("KERNEL_OK")
</pallas_src>

<mosaic_0001>
module attributes {stable_mosaic.version = 11 : i64} {
  func.func @_ce_label_smooth_kernel(%arg0: i32, %arg1: memref<8x32xf32, #tpu.memory_space<vmem>>, %arg2: memref<8x1xi32, #tpu.memory_space<vmem>>, %arg3: memref<1x1xf32, #tpu.memory_space<vmem>>, %arg4: memref<1x1xf32, #tpu.memory_space<vmem>>) attributes {dimension_semantics = [#tpu.dimension_semantics<arbitrary>], iteration_bounds = array<i64: 3>, scalar_prefetch = 0 : i64, scratch_operands = 1 : i64, tpu.core_type = #tpu.core_type<tc>, window_params = [{transform_indices = @transform_0, window_bounds = array<i64: 8, 32>}, {transform_indices = @transform_1, window_bounds = array<i64: 8, 1>}, {pipeline_mode = #tpu.pipeline_mode<synchronous>, transform_indices = @transform_2, window_bounds = array<i64: 1, 1>}]} {
    %c0_i32 = arith.constant 0 : i32
    %0 = arith.cmpi eq, %arg0, %c0_i32 : i32
    %1 = arith.extui %0 : i1 to i32
    %c0_i32_0 = arith.constant 0 : i32
    %2 = arith.cmpi ne, %1, %c0_i32_0 : i32
    scf.if %2 {
      %cst_16 = arith.constant 0.000000e+00 : f32
      %45 = vector.broadcast %cst_16 : f32 to vector<1x1xf32>
      %c0_17 = arith.constant 0 : index
      %c0_18 = arith.constant 0 : index
      %46 = vector.load %arg4[%c0_17, %c0_18] : memref<1x1xf32, #tpu.memory_space<vmem>>, vector<1x1xf32>
      tpu.vector_store %arg4[%c0_17, %c0_18], %45 {strides = array<i32>} : memref<1x1xf32, #tpu.memory_space<vmem>>, vector<1x1xf32>,
    } else {
    }
    %c0 = arith.constant 0 : index
    %c0_1 = arith.constant 0 : index
    %3 = vector.load %arg1[%c0, %c0_1] : memref<8x32xf32, #tpu.memory_space<vmem>>, vector<8x32xf32>
    %c0_2 = arith.constant 0 : index
    %c0_3 = arith.constant 0 : index
    %4 = vector.load %arg2[%c0_2, %c0_3] : memref<8x1xi32, #tpu.memory_space<vmem>>, vector<8x1xi32>
    %cst = arith.constant dense<0xFF800000> : vector<8xf32>
    %5 = vector.multi_reduction <maximumf>, %3, %cst [1] : vector<8x32xf32> to vector<8xf32>
    %6 = vector.shape_cast %5 : vector<8xf32> to vector<8x1xf32>
    %7 = vector.broadcast %6 : vector<8x1xf32> to vector<8x32xf32>
    %8 = arith.subf %3, %7 : vector<8x32xf32>
    %9 = math.exp %8 : vector<8x32xf32>
    %cst_4 = arith.constant dense<0.000000e+00> : vector<8xf32>
    %10 = vector.multi_reduction <add>, %9, %cst_4 [1] : vector<8x32xf32> to vector<8xf32>
    %11 = vector.shape_cast %10 : vector<8xf32> to vector<8x1xf32>
    %12 = math.log %11 : vector<8x1xf32>
    %13 = arith.addf %6, %12 : vector<8x1xf32>
    %14 = tpu.iota {dimensions = array<i32: 1>} : vector<8x32xi32>
    %15 = vector.broadcast %4 : vector<8x1xi32> to vector<8x32xi32>
    %16 = arith.cmpi eq, %14, %15 : vector<8x32xi32>
    %cst_5 = arith.constant 0.899999976 : f32
    %cst_6 = arith.constant 0.000000e+00 : f32
    %17 = vector.broadcast %cst_5 : f32 to vector<8x32xf32>
    %18 = vector.broadcast %cst_6 : f32 to vector<8x32xf32>
    %19 = arith.select %16, %17, %18 : vector<8x32xi1>, vector<8x32xf32>
    %cst_7 = arith.constant 3.125000e-03 : f32
    %20 = vector.broadcast %cst_7 : f32 to vector<8x32xf32>
    %21 = arith.addf %20, %19 : vector<8x32xf32>
    %22 = arith.mulf %21, %3 : vector<8x32xf32>
    %cst_8 = arith.constant dense<0.000000e+00> : vector<8xf32>
    %23 = vector.multi_reduction <add>, %22, %cst_8 [1] : vector<8x32xf32> to vector<8xf32>
    %24 = vector.shape_cast %23 : vector<8xf32> to vector<8x1xf32>
    %25 = arith.subf %13, %24 : vector<8x1xf32>
    %26 = tpu.iota {dimensions = array<i32: 0>} : vector<8x1xi32>
    %c8_i32 = arith.constant 8 : i32
    %27 = arith.muli %arg0, %c8_i32 : i32
    %28 = vector.broadcast %27 : i32 to vector<8x1xi32>
    %29 = arith.addi %26, %28 : vector<8x1xi32>
    %c20_i32 = arith.constant 20 : i32
    %30 = vector.broadcast %c20_i32 : i32 to vector<8x1xi32>
    %31 = arith.cmpi slt, %29, %30 : vector<8x1xi32>
    %cst_9 = arith.constant 0.000000e+00 : f32
    %32 = vector.broadcast %cst_9 : f32 to vector<8x1xf32>
    %33 = arith.select %31, %25, %32 : vector<8x1xi1>, vector<8x1xf32>
    %c0_10 = arith.constant 0 : index
    %c0_11 = arith.constant 0 : index
    %34 = vector.load %arg4[%c0_10, %c0_11] : memref<1x1xf32, #tpu.memory_space<vmem>>, vector<1x1xf32>
    %35 = vector.shape_cast %33 : vector<8x1xf32> to vector<1x8x1xf32>
    %cst_12 = arith.constant dense<0.000000e+00> : vector<1xf32>
    %36 = vector.multi_reduction <add>, %35, %cst_12 [1, 2] : vector<1x8x1xf32> to vector<1xf32>
    %37 = vector.shape_cast %36 : vector<1xf32> to vector<1x1x1xf32>
    %38 = vector.extract %37[0, 0, 0] : f32 from vector<1x1x1xf32>
    %39 = vector.broadcast %38 : f32 to vector<1x1xf32>
    %40 = arith.addf %34, %39 : vector<1x1xf32>
    %c0_13 = arith.constant 0 : index
    %c0_14 = arith.constant 0 : index
    %41 = vector.load %arg4[%c0_13, %c0_14] : memref<1x1xf32, #tpu.memory_space<vmem>>, vector<1x1xf32>
    tpu.vector_store %arg4[%c0_13, %c0_14], %40 {strides = array<i32>} : memref<1x1xf32, #tpu.memory_space<vmem>>, vector<1x1xf32>,
    %c2_i32 = arith.constant 2 : i32
    %42 = arith.cmpi eq, %arg0, %c2_i32 : i32
    %43 = arith.extui %42 : i1 to i32
    %c0_i32_15 = arith.constant 0 : i32
    %44 = arith.cmpi ne, %43, %c0_i32_15 : i32
    scf.if %44 {
      %c0_16 = arith.constant 0 : index
      %c0_17 = arith.constant 0 : index
      %45 = vector.load %arg4[%c0_16, %c0_17] : memref<1x1xf32, #tpu.memory_space<vmem>>, vector<1x1xf32>
      %cst_18 = arith.constant 5.000000e-02 : f32
      %46 = vector.broadcast %cst_18 : f32 to vector<1x1xf32>
      %47 = arith.mulf %45, %46 : vector<1x1xf32>
      %c0_19 = arith.constant 0 : index
      %c0_20 = arith.constant 0 : index
      %48 = vector.load %arg3[%c0_19, %c0_20] : memref<1x1xf32, #tpu.memory_space<vmem>>, vector<1x1xf32>
      tpu.vector_store %arg3[%c0_19, %c0_20], %47 {strides = array<i32>} : memref<1x1xf32, #tpu.memory_space<vmem>>, vector<1x1xf32>,
    } else {
    }
    return
  }
  func.func @transform_0(%arg0: i32) -> (i32, i32) {
    %c0_i32 = arith.constant 0 : i32
    %c0_i32_0 = arith.constant 0 : i32
    return %arg0, %c0_i32 : i32, i32
  }
  func.func @transform_1(%arg0: i32) -> (i32, i32) {
    %c0_i32 = arith.constant 0 : i32
    %c0_i32_0 = arith.constant 0 : i32
    return %arg0, %c0_i32 : i32, i32
  }
  func.func @transform_2(%arg0: i32) -> (i32, i32) {
    %c0_i32 = arith.constant 0 : i32
    %c0_i32_0 = arith.constant 0 : i32
    %c0_i32_1 = arith.constant 0 : i32
    return %c0_i32, %c0_i32_0 : i32, i32
  }
}

</mosaic_0001>

<llo_original>
// kernel: tpu_custom_call.1
$region0: #{tpu_custom_call.1}
  #allocation0 [shape = 'u32[]', space=smem, size = 0x4, offset = 0x4, fixed_abs, tag = 'smem constant byte address 0x4 - core index']
  #allocation1 [shape = 'u32[144,128]{1,0:T(1,128)}', space=vmem, size = 0x12000, scoped, tag = 'internal scratch']
  #allocation2 [shape = 'f32[1,1]{1,0:T(1,128)}', space=vmem, size = 0x200, scoped, tag = 'scratch operand']
  %s0 = inlined_call_operand.vmem [shape: f32[20,32], index: 0, kind: input, shape index: {}]
  %s1 = inlined_call_operand.vmem [shape: s32[20,1], index: 1, kind: input, shape index: {}]
  %s2 = inlined_call_operand.hbm [shape: f32[1,1], index: 2, kind: output, shape index: {}]
  %s3 = sld [smem:[#allocation0]]
  $region49: #{tpu_custom_call.1} parent=0
    _
  %s5 = ssub.s32 1, %s3
  %s6 = scalar_select 0, %s5, %s3
  $region1: #{tpu_custom_call.1} parent=0
    #allocation3 [shape = 'u8[512]{0}', space=vmem, size = 0x400, scoped, tag = 'output window, operand 0, single buffered']
    #allocation4 [shape = 's32[2]{0}', space=sflag, size = 0x8, scoped, tag = 'scoped memory for tpu_custom_call.1']
    %7 = vsyncpa [#allocation4], 0
    loop: start=0, step=1, limit=5
    $region2: #{tpu_custom_call.1} parent=1 // loop_pre_header
      _
    $region3: #{tpu_custom_call.1} parent=1 // loop_header
      %s9 = sphi 0, %s13
      %p10 = scmp.ge.s32.totalorder %s9, 5
      %s19 = sphi 0, %s21
      %s22 = sphi 0, %s19
      %s23 = sphi 0, %s22
      %s39 = sphi 0, %s23
      %s45 = sphi 0, %s47
      %s48 = sphi 0, %s45
      %s49 = sphi 0, %s48
      %s65 = sphi 0, %s49
      %s69 = sphi 0, %s69
      %s71 = sphi 0, %s69
      %s72 = sphi 0, %s71
      %s86 = sphi 0, %s72
    $region4: #{tpu_custom_call.1} parent=1 // loop_header_branch
      %12 = sbr.rel (%p10) target = $region8
    $region5: #{tpu_custom_call.1} parent=1 // loop_body
      %s14 = ssub.s32 %s9, 1
      %s15 = ssub.s32 %s9, 2
      %s16 = sadd.s32 %s9, 1
      %s17 = ssub.s32 %s9, %s16
      %p18 = scmp.eq.s32.totalorder %s17, 0
      %s20 = sadd.s32 %s19, 1
      %s21 = scalar_select %p18, %s19, %s20
      %p24 = pneg %p18
      %p25 = scmp.eq.s32.totalorder %s9, 2
      %p26 = por %p24, %p25
      %p27 = scmp.ne.s32.totalorder %s19, %s22
      %p28 = scmp.eq.s32.totalorder %s9, 0
      %p29 = por %p27, %p28
      %p30 = scmp.ne.s32.totalorder %s19, %s22
      %p31 = scmp.eq.s32.totalorder %s14, 2
      %p32 = por %p30, %p31
      %p33 = scmp.ne.s32.totalorder %s22, %s23
      %p34 = scmp.eq.s32.totalorder %s14, 0
      %p35 = por %p33, %p34
      %p36 = scmp.ne.s32.totalorder %s22, %s23
      %p37 = scmp.eq.s32.totalorder %s15, 2
      %p38 = por %p36, %p37
      %p40 = scmp.ne.s32.totalorder %s23, %s39
      %p41 = scmp.eq.s32.totalorder %s15, 0
      %p42 = por %p40, %p41
      %s43 = ssub.s32 %s9, %s16
      %p44 = scmp.eq.s32.totalorder %s43, 0
      %s46 = sadd.s32 %s45, 1
      %s47 = scalar_select %p44, %s45, %s46
      %p50 = pneg %p44
      %p51 = scmp.eq.s32.totalorder %s9, 2
      %p52 = por %p50, %p51
      %p53 = scmp.ne.s32.totalorder %s45, %s48
      %p54 = scmp.eq.s32.totalorder %s9, 0
      %p55 = por %p53, %p54
      %p56 = scmp.ne.s32.totalorder %s45, %s48
      %p57 = scmp.eq.s32.totalorder %s14, 2
      %p58 = por %p56, %p57
      %p59 = scmp.ne.s32.totalorder %s48, %s49
      %p60 = scmp.eq.s32.totalorder %s14, 0
      %p61 = por %p59, %p60
      %p62 = scmp.ne.s32.totalorder %s48, %s49
      %p63 = scmp.eq.s32.totalorder %s15, 2
      %p64 = por %p62, %p63
      %p66 = scmp.ne.s32.totalorder %s49, %s65
      %p67 = scmp.eq.s32.totalorder %s15, 0
      %p68 = por %p66, %p67
      %s70 = sadd.s32 %s69, 1
      %p73 = scmp.eq.s32.totalorder %s9, 2
      %p74 = scmp.ne.s32.totalorder %s69, %s71
      %p75 = scmp.eq.s32.totalorder %s9, 0
      %p76 = por %p74, %p75
      %p77 = scmp.ne.s32.totalorder %s69, %s71
      %p78 = scmp.eq.s32.totalorder %s14, 2
      %p79 = por %p77, %p78
      %p80 = scmp.ne.s32.totalorder %s71, %s72
      %p81 = scmp.eq.s32.totalorder %s14, 0
      %p82 = por %p80, %p81
      %p83 = scmp.ne.s32.totalorder %s71, %s72
      %p84 = scmp.eq.s32.totalorder %s15, 2
      %p85 = por %p83, %p84
      %p87 = scmp.ne.s32.totalorder %s72, %s86
      %p88 = scmp.eq.s32.totalorder %s15, 0
      %p89 = por %p87, %p88
      %p90 = scmp.le.s32.totalorder 1, %s9
      %p91 = scmp.lt.s32.totalorder %s9, 4
      %p92 = pnand %p90, %p91
      %p93 = pneg %p92
      // Predicated region
      $region9: #{tpu_custom_call.1} parent=5 // pred_check
        _
      $region10: #{tpu_custom_call.1} parent=5 // pred_check_branch
        %95 = sbr.rel (%p92) target = $region12
      $region11: #{tpu_custom_call.1} parent=5 // pred_region
        %s96 = ssub.s32 %s9, 1
      $region12: #{tpu_custom_call.1} parent=5 // pred_fallthru
        _
      %p97 = scmp.lt.s32.totalorder %s9, 3
      // Predicated region
      $region13: #{tpu_custom_call.1} parent=5 // pred_check
        %p98 = pneg %p97
      $region14: #{tpu_custom_call.1} parent=5 // pred_check_branch
        %100 = sbr.rel (%p98) target = $region16
      $region15: #{tpu_custom_call.1} parent=5 // pred_region
        // Predicated region
        $region17: #{tpu_custom_call.1} parent=15 // pred_check
          %p101 = pneg %p29
        $region18: #{tpu_custom_call.1} parent=15 // pred_check_branch
          %103 = sbr.rel (%p101) target = $region20
        $region19: #{tpu_custom_call.1} parent=15 // pred_region
          %p104 = scmp.lt.s32.totalorder %s9, 2
          %s105 = scalar_select %p104, %s9, 2
          %s106 = smul.addr %s105, 8
          %s107 = scalar_lea.vmem %s0, %s106
        $region20: #{tpu_custom_call.1} parent=15 // pred_fallthru
          _
        // Predicated region
        $region21: #{tpu_custom_call.1} parent=15 // pred_check
          %p108 = pneg %p55
        $region22: #{tpu_custom_call.1} parent=15 // pred_check_branch
          %110 = sbr.rel (%p108) target = $region24
        $region23: #{tpu_custom_call.1} parent=15 // pred_region
          %p111 = scmp.lt.s32.totalorder %s9, 2
          %s112 = scalar_select %p111, %s9, 2
          %s113 = smul.addr %s112, 8
          %s114 = scalar_lea.vmem %s1, %s113
        $region24: #{tpu_custom_call.1} parent=15 // pred_fallthru
          _
      $region16: #{tpu_custom_call.1} parent=5 // pred_fallthru
        _
      %p115 = scmp.le.s32.totalorder 1, %s9
      %p116 = scmp.lt.s32.totalorder %s9, 4
      %p117 = pnand %p115, %p116
      %p118 = pneg %p117
      // Predicated region
      $region25: #{tpu_custom_call.1} parent=5 // pred_check
        _
      $region26: #{tpu_custom_call.1} parent=5 // pred_check_branch
        %120 = sbr.rel (%p117) target = $region28
      $region27: #{tpu_custom_call.1} parent=5 // pred_region
        %s121 = ssub.s32 %s9, 1
        %p122 = scmp.lt.s32.totalorder %s14, 2
        %s123 = scalar_select %p122, %s14, 2
        %s124 = smul.addr %s123, 8
        %s125 = scalar_lea.vmem %s0, %s124
        %p126 = pneg %p35
        %p127 = pneg %p32
        %p128 = scmp.lt.s32.totalorder %s14, 2
        %s129 = scalar_select %p128, %s14, 2
        %s130 = smul.addr %s129, 8
        %s131 = scalar_lea.vmem %s1, %s130
        %p132 = pneg %p61
        %p133 = pneg %p58
        %p134 = pneg %p82
        %p135 = pneg %p79
        %p136 = scmp.lt.s32.totalorder %s14, 2
        %s137 = scalar_select %p136, %s14, 2
        %s138 = smul.addr %s137, 8
        %s139 = scalar_lea.vmem %s0, %s138
        %p140 = scmp.lt.s32.totalorder %s14, 2
        %s141 = scalar_select %p140, %s14, 2
        %s142 = smul.addr %s141, 8
        %s143 = scalar_lea.vmem %s1, %s142
        %p144 = scmp.eq.s32.totalorder %s14, 0
        // Predicated region
        $region29: #{tpu_custom_call.1} parent=27 // pred_check
          %p145 = pneg %p144
        $region30: #{tpu_custom_call.1} parent=27 // pred_check_branch
          %147 = sbr.rel (%p145) target = $region32
        $region31: #{tpu_custom_call.1} parent=27 // pred_region
          %vm148 = vcmask 0
          %149 = vst.msk [vmem:[#allocation2] sm:$0x1] %vm148, 0.0
        $region32: #{tpu_custom_call.1} parent=27 // pred_fallthru
          _
        %v150 = vld [vmem:[%s139] sm:$0xff]
        %v151 = vld [vmem:[%s143] sm:$0xff]
        %vm152 = vcmask 261120
        %v153 = vsel %vm152, %v150, -inf
        %154 = vmax.xlane.f32.xlu0 %v153
        %v155 = vpop.xlane.xlu0 %154
        %v156 = vsub.f32 %v150, %v155
        %v157 = vmul.f32 %v156, 1.442695
        %v158 = vpow.pop %v157
        %v159 = vsel %vm152, %v158, 0.0
        %160 = vadd.xlane.f32.xlu0 %v159
        %v161 = vpop.xlane.xlu0 %160
        %v162 = vlog2.pop %v161
        %v163 = vmul.f32 %v162, 0.6931472
        %v164 = vadd.f32 %v155, %v163
        %v165 = vlaneseq
        %v166 = vand.u32 %v165, 127
        %167 = vset.pattern.permute.xlu0 0
        %168 = vperm.xlu0 %167, %v151
        %v169 = vpop.permute.xlu0 %168
        %vm170 = vcmp.eq.s32.totalorder %v166, %v169
        %v171 = vsel %vm170, 0.9, 0.0
        %v172 = vadd.f32 %v171, 0.003125
        %v173 = vmul.f32 %v172, %v150
        %v174 = vsel %vm152, %v173, 0.0
        %175 = vadd.xlane.f32.xlu0 %v174
        %v176 = vpop.xlane.xlu0 %175
        %v177 = vsub.f32 %v164, %v176
        %v178 = vlaneseq
        %v179 = vshrl.u32 %v178, 7
        %s180 = smul.u32 %s14, 8
        %v181 = vstv %s180
        %v182 = vadd.s32 %v179, %v181
        %vm183 = vcmp.lt.s32.totalorder %v182, 20
        %v184 = vsel %vm183, %v177, 0.0
        %v185 = vld [vmem:[#allocation2] sm:$0x1]
        %vm186 = vcmask 7168
        %v187 = vsel %vm186, %v184, 0.0
        %188 = vadd.xlane.f32.xlu0 %v187
        %v189 = vpop.xlane.xlu0 %188
        %v190 = vrot.slane %v189, 4
        %v191 = vadd.f32 %v189, %v190
        %v192 = vrot.slane %v191, 2
        %v193 = vadd.f32 %v191, %v192
        %v194 = vrot.slane %v193, 1
        %v195 = vadd.f32 %v193, %v194
        %s196 = vtos %v195
        %v197 = vstv %s196
        %v198 = vadd.f32 %v185, %v197
        %vm199 = vcmask 0
        %200 = vst.msk [vmem:[#allocation2] sm:$0x1] %vm199, %v198
        %p201 = scmp.eq.s32.totalorder %s14, 2
        // Predicated region
        $region33: #{tpu_custom_call.1} parent=27 // pred_check
          %p202 = pneg %p201
        $region34: #{tpu_custom_call.1} parent=27 // pred_check_branch
          %204 = sbr.rel (%p202) target = $region36
        $region35: #{tpu_custom_call.1} parent=27 // pred_region
          %v205 = vld [vmem:[#allocation2] sm:$0x1]
          %v206 = vmul.f32 %v205, 0.05
          %207 = vst.msk [vmem:[#allocation3] sm:$0x1] %vm199, %v206
        $region36: #{tpu_custom_call.1} parent=27 // pred_fallthru
          _
        // Predicated region
        $region37: #{tpu_custom_call.1} parent=27 // pred_check
          %p208 = pneg %p79
        $region38: #{tpu_custom_call.1} parent=27 // pred_check_branch
          %210 = sbr.rel (%p208) target = $region40
        $region39: #{tpu_custom_call.1} parent=27 // pred_region
          %s212 = ssub.s32 16, 16
          %213 = vsyncadd [#allocation4], %s212
          %s215 = sshll.u32 [#allocation3], 4
          %s216 = int_to_ptr.vmem [resolvable:$true] %s215
          %218 = dma.vmem_to_hbm [thread:$0]  %s216, 16, %s2, [#allocation4]
        $region40: #{tpu_custom_call.1} parent=27 // pred_fallthru
          _
        // Predicated region
        $region41: #{tpu_custom_call.1} parent=27 // pred_check
          %p219 = pneg %p79
        $region42: #{tpu_custom_call.1} parent=27 // pred_check_branch
          %221 = sbr.rel (%p219) target = $region44
        $region43: #{tpu_custom_call.1} parent=27 // pred_region
          %222 = dma.done [#allocation4], 16
        $region44: #{tpu_custom_call.1} parent=27 // pred_fallthru
          _
      $region28: #{tpu_custom_call.1} parent=5 // pred_fallthru
        _
      %p223 = scmp.le.s32.totalorder 2, %s9
      // Predicated region
      $region45: #{tpu_custom_call.1} parent=5 // pred_check
        %p224 = pneg %p223
      $region46: #{tpu_custom_call.1} parent=5 // pred_check_branch
        %226 = sbr.rel (%p224) target = $region48
      $region47: #{tpu_custom_call.1} parent=5 // pred_region
        %s227 = ssub.s32 %s9, 2
      $region48: #{tpu_custom_call.1} parent=5 // pred_fallthru
        _
    $region6: #{tpu_custom_call.1} parent=1 // loop_footer
      %s13 = sadd.s32 1, %s9
    $region7: #{tpu_custom_call.1} parent=1 // loop_footer_branch
      %8 = sbr.rel target = $region3
    $region8: #{tpu_custom_call.1} parent=1 // loop_exit
      _
    %228 = vsyncpa [#allocation4], 1
    %s229 = scalar_lea.sflag [#allocation4], 1
    %230 = vsyncpa %s229, 1

</llo_original>
